<compile_context>
chip_gen: v5e
topology: v5e:2x2
jax: 0.10.0
libtpu: 0.0.40
codegen_flags: <defaults>
</compile_context>

<pallas_src>
import functools

import jax
import jax.numpy as jnp
from jax.experimental import pallas as pl
from jax.experimental.pallas import tpu as pltpu


def _make_focal_kernel(alpha: float, gamma: float, n_total: int):
    alpha_f = float(alpha)
    gamma_f = float(gamma)
    gamma_is_small_int = float(gamma_f).is_integer() and 0.0 <= gamma_f <= 16.0

    def kernel(logits_ref, targets_ref, out_ref, acc_ref):
        step = pl.program_id(0)
        num_steps = pl.num_programs(0)

        @pl.when(step == 0)
        def _init():
            acc_ref[...] = jnp.zeros_like(acc_ref)

        logits = logits_ref[...].astype(jnp.float32)       # (C, T)
        targets = targets_ref[...]                          # (1, T) int32
        c, t = logits.shape

        # Numerically stable log-softmax over the class (sublane) axis.
        m = jnp.max(logits, axis=0, keepdims=True)           # (1, T)
        lse = jnp.log(jnp.sum(jnp.exp(logits - m), axis=0, keepdims=True)) + m

        # Gather the target-class logit via iota/compare/select (C is tiny;
        # a one-hot MXU matmul would be ~4% utilization for no gain).
        cls = jax.lax.broadcasted_iota(jnp.int32, (c, t), 0)  # class id per elem
        tgt_logit = jnp.sum(jnp.where(cls == targets, logits, 0.0),
                            axis=0, keepdims=True)            # (1, T)

        ce = lse - tgt_logit                                   # (1, T)

        # Mask out padded samples in the (possibly ragged) last tile.
        col = jax.lax.broadcasted_iota(jnp.int32, (1, t), 1) + step * t
        ce = jnp.where(col < n_total, ce, 0.0)

        acc_ref[...] += jnp.sum(ce, axis=1, keepdims=True)     # (1, 1)

        @pl.when(step == num_steps - 1)
        def _finalize():
            # reduction='mean' of nn.CrossEntropyLoss: divide by global N once.
            ce_mean = acc_ref[...] / jnp.float32(n_total)       # (1, 1)
            pt = jnp.exp(-ce_mean)
            one_minus_pt = 1.0 - pt
            if gamma_is_small_int:
                focal = jnp.ones_like(one_minus_pt)
                for _ in range(int(gamma_f)):
                    focal = focal * one_minus_pt
            else:
                focal = one_minus_pt ** jnp.float32(gamma_f)
            # F_loss.mean() of a scalar == the scalar itself.
            out_ref[...] = jnp.float32(alpha_f) * focal * ce_mean

    return kernel


def _pick_tile_n(n: int, c: int, itemsize: int) -> int:
    """Samples-per-tile on the lane axis. Small enough that double-buffered
    tiles fit comfortably under every generation's scoped VMEM default."""
    c_pad = ((c + 7) // 8) * 8
    budget_bytes = 2 * 1024 * 1024        # per logits buffer (x2 for buffering)
    tile = budget_bytes // max(1, c_pad * itemsize)
    tile = min(max(tile, 128), 8192)
    tile = (tile // 128) * 128
    if n <= tile:
        return n                           # single full-width block (always legal)
    return tile


@functools.partial(jax.jit, static_argnames=("alpha", "gamma"))
def focal_loss(logits: jax.Array, targets: jax.Array,
               alpha: float = 1.0, gamma: float = 2.0) -> jax.Array:
    """Pallas TPU implementation of FocalLoss.forward. Returns a scalar."""
    n, c = logits.shape

    # Lane-dense (C, N) layout: class axis on sublanes, samples on lanes.
    # TODO(synk): ideally produced upstream instead of a wrapper transpose.
    logits_cn = logits.T                                   # (C, N), native dtype
    targets_row = targets.astype(jnp.int32).reshape(1, n)  # (1, N)

    tile_n = _pick_tile_n(n, c, jnp.dtype(logits.dtype).itemsize)
    grid = (pl.cdiv(n, tile_n),)

    out = pl.pallas_call(
        _make_focal_kernel(alpha, gamma, n),
        out_shape=jax.ShapeDtypeStruct((1, 1), jnp.float32),
        grid_spec=pltpu.PrefetchScalarGridSpec(
            num_scalar_prefetch=0,
            grid=grid,
            in_specs=[
                pl.BlockSpec((c, tile_n), lambda i: (0, i)),
                pl.BlockSpec((1, tile_n), lambda i: (0, i)),
            ],
            out_specs=pl.BlockSpec((1, 1), lambda i: (0, 0)),
            scratch_shapes=[pltpu.VMEM((1, 1), jnp.float32)],
        ),
        compiler_params=pltpu.CompilerParams(
            dimension_semantics=("arbitrary",)),
    )(logits_cn, targets_row)
    return out[0, 0]


def _reference_focal_loss(logits, targets, alpha=1.0, gamma=2.0):
    # Pure-JAX reference mirroring the PyTorch module.
    logz = jax.nn.log_softmax(logits.astype(jnp.float32), axis=-1)
    ce_per = -jnp.take_along_axis(
        logz, targets[:, None].astype(jnp.int32), axis=-1)[:, 0]
    ce = jnp.mean(ce_per)
    pt = jnp.exp(-ce)
    return alpha * (1.0 - pt) ** gamma * ce


if __name__ == "__main__":
    key = jax.random.PRNGKey(0)
    k_logits, k_targets, k_logits2, k_targets2 = jax.random.split(key, 4)

    # Small case matching the module (5 classes, as implied by self.weight).
    N, C = 8, 5
    logits = jax.random.normal(k_logits, (N, C), dtype=jnp.float32)
    targets = jax.random.randint(k_targets, (N,), 0, C, dtype=jnp.int32)

    loss = focal_loss(logits, targets, alpha=1.0, gamma=2.0)
    jax.block_until_ready(loss)
    ref = _reference_focal_loss(logits, targets, alpha=1.0, gamma=2.0)
    assert jnp.allclose(loss, ref, atol=1e-5, rtol=1e-5), (loss, ref)

    # Larger case that exercises the multi-tile grid + ragged-tail masking.
    N2 = 20000
    logits2 = jax.random.normal(k_logits2, (N2, C), dtype=jnp.float32)
    targets2 = jax.random.randint(k_targets2, (N2,), 0, C, dtype=jnp.int32)

    loss2 = focal_loss(logits2, targets2, alpha=1.0, gamma=2.0)
    jax.block_until_ready(loss2)
    ref2 = _reference_focal_loss(logits2, targets2, alpha=1.0, gamma=2.0)
    assert jnp.allclose(loss2, ref2, atol=1e-3, rtol=1e-3), (loss2, ref2)

    print("KERNEL_OK")
</pallas_src>

<mosaic_0001>
module attributes {stable_mosaic.version = 11 : i64} {
  func.func @kernel(%arg0: i32, %arg1: memref<5x8xf32, #tpu.memory_space<vmem>>, %arg2: memref<1x8xi32, #tpu.memory_space<vmem>>, %arg3: memref<1x1xf32, #tpu.memory_space<vmem>>, %arg4: memref<1x1xf32, #tpu.memory_space<vmem>>) attributes {dimension_semantics = [#tpu.dimension_semantics<arbitrary>], iteration_bounds = array<i64: 1>, scalar_prefetch = 0 : i64, scratch_operands = 1 : i64, tpu.core_type = #tpu.core_type<tc>, window_params = [{transform_indices = @transform_0, window_bounds = array<i64: 5, 8>}, {transform_indices = @transform_1, window_bounds = array<i64: 1, 8>}, {pipeline_mode = #tpu.pipeline_mode<synchronous>, transform_indices = @transform_2, window_bounds = array<i64: 1, 1>}]} {
    %c0_i32 = arith.constant 0 : i32
    %0 = arith.cmpi eq, %arg0, %c0_i32 : i32
    %1 = arith.extui %0 : i1 to i32
    %c0_i32_0 = arith.constant 0 : i32
    %2 = arith.cmpi ne, %1, %c0_i32_0 : i32
    scf.if %2 {
      %cst_16 = arith.constant 0.000000e+00 : f32
      %38 = vector.broadcast %cst_16 : f32 to vector<1x1xf32>
      %c0_17 = arith.constant 0 : index
      %c0_18 = arith.constant 0 : index
      %39 = vector.load %arg4[%c0_17, %c0_18] : memref<1x1xf32, #tpu.memory_space<vmem>>, vector<1x1xf32>
      tpu.vector_store %arg4[%c0_17, %c0_18], %38 {strides = array<i32>} : memref<1x1xf32, #tpu.memory_space<vmem>>, vector<1x1xf32>,
    } else {
    }
    %c0 = arith.constant 0 : index
    %c0_1 = arith.constant 0 : index
    %3 = vector.load %arg1[%c0, %c0_1] : memref<5x8xf32, #tpu.memory_space<vmem>>, vector<5x8xf32>
    %c0_2 = arith.constant 0 : index
    %c0_3 = arith.constant 0 : index
    %4 = vector.load %arg2[%c0_2, %c0_3] : memref<1x8xi32, #tpu.memory_space<vmem>>, vector<1x8xi32>
    %cst = arith.constant dense<0xFF800000> : vector<8xf32>
    %5 = vector.multi_reduction <maximumf>, %3, %cst [0] : vector<5x8xf32> to vector<8xf32>
    %6 = vector.shape_cast %5 : vector<8xf32> to vector<1x8xf32>
    %7 = vector.broadcast %6 : vector<1x8xf32> to vector<5x8xf32>
    %8 = arith.subf %3, %7 : vector<5x8xf32>
    %9 = math.exp %8 : vector<5x8xf32>
    %cst_4 = arith.constant dense<0.000000e+00> : vector<8xf32>
    %10 = vector.multi_reduction <add>, %9, %cst_4 [0] : vector<5x8xf32> to vector<8xf32>
    %11 = vector.shape_cast %10 : vector<8xf32> to vector<1x8xf32>
    %12 = math.log %11 : vector<1x8xf32>
    %13 = arith.addf %12, %6 : vector<1x8xf32>
    %14 = tpu.iota {dimensions = array<i32: 0>} : vector<5x8xi32>
    %15 = vector.broadcast %4 : vector<1x8xi32> to vector<5x8xi32>
    %16 = arith.cmpi eq, %14, %15 : vector<5x8xi32>
    %cst_5 = arith.constant 0.000000e+00 : f32
    %17 = vector.broadcast %cst_5 : f32 to vector<5x8xf32>
    %18 = arith.select %16, %3, %17 : vector<5x8xi1>, vector<5x8xf32>
    %cst_6 = arith.constant dense<0.000000e+00> : vector<8xf32>
    %19 = vector.multi_reduction <add>, %18, %cst_6 [0] : vector<5x8xf32> to vector<8xf32>
    %20 = vector.shape_cast %19 : vector<8xf32> to vector<1x8xf32>
    %21 = arith.subf %13, %20 : vector<1x8xf32>
    %22 = tpu.iota {dimensions = array<i32: 1>} : vector<1x8xi32>
    %c8_i32 = arith.constant 8 : i32
    %23 = arith.muli %arg0, %c8_i32 : i32
    %24 = vector.broadcast %23 : i32 to vector<1x8xi32>
    %25 = arith.addi %22, %24 : vector<1x8xi32>
    %c8_i32_7 = arith.constant 8 : i32
    %26 = vector.broadcast %c8_i32_7 : i32 to vector<1x8xi32>
    %27 = arith.cmpi slt, %25, %26 : vector<1x8xi32>
    %cst_8 = arith.constant 0.000000e+00 : f32
    %28 = vector.broadcast %cst_8 : f32 to vector<1x8xf32>
    %29 = arith.select %27, %21, %28 : vector<1x8xi1>, vector<1x8xf32>
    %c0_9 = arith.constant 0 : index
    %c0_10 = arith.constant 0 : index
    %30 = vector.load %arg4[%c0_9, %c0_10] : memref<1x1xf32, #tpu.memory_space<vmem>>, vector<1x1xf32>
    %cst_11 = arith.constant dense<0.000000e+00> : vector<1xf32>
    %31 = vector.multi_reduction <add>, %29, %cst_11 [1] : vector<1x8xf32> to vector<1xf32>
    %32 = vector.shape_cast %31 : vector<1xf32> to vector<1x1xf32>
    %33 = arith.addf %30, %32 : vector<1x1xf32>
    %c0_12 = arith.constant 0 : index
    %c0_13 = arith.constant 0 : index
    %34 = vector.load %arg4[%c0_12, %c0_13] : memref<1x1xf32, #tpu.memory_space<vmem>>, vector<1x1xf32>
    tpu.vector_store %arg4[%c0_12, %c0_13], %33 {strides = array<i32>} : memref<1x1xf32, #tpu.memory_space<vmem>>, vector<1x1xf32>,
    %c0_i32_14 = arith.constant 0 : i32
    %35 = arith.cmpi eq, %arg0, %c0_i32_14 : i32
    %36 = arith.extui %35 : i1 to i32
    %c0_i32_15 = arith.constant 0 : i32
    %37 = arith.cmpi ne, %36, %c0_i32_15 : i32
    scf.if %37 {
      %c0_16 = arith.constant 0 : index
      %c0_17 = arith.constant 0 : index
      %38 = vector.load %arg4[%c0_16, %c0_17] : memref<1x1xf32, #tpu.memory_space<vmem>>, vector<1x1xf32>
      %cst_18 = arith.constant 8.000000e+00 : f32
      %39 = vector.broadcast %cst_18 : f32 to vector<1x1xf32>
      %40 = arith.divf %38, %39 : vector<1x1xf32>
      %cst_19 = arith.constant 0.000000e+00 : f32
      %41 = vector.broadcast %cst_19 : f32 to vector<1x1xf32>
      %42 = arith.subf %41, %40 : vector<1x1xf32>
      %43 = math.exp %42 : vector<1x1xf32>
      %cst_20 = arith.constant 1.000000e+00 : f32
      %44 = vector.broadcast %cst_20 : f32 to vector<1x1xf32>
      %45 = arith.subf %44, %43 : vector<1x1xf32>
      %cst_21 = arith.constant 1.000000e+00 : f32
      %46 = vector.broadcast %cst_21 : f32 to vector<1x1xf32>
      %47 = arith.mulf %46, %45 : vector<1x1xf32>
      %48 = arith.mulf %47, %45 : vector<1x1xf32>
      %cst_22 = arith.constant 1.000000e+00 : f32
      %49 = vector.broadcast %cst_22 : f32 to vector<1x1xf32>
      %50 = arith.mulf %49, %48 : vector<1x1xf32>
      %51 = arith.mulf %50, %40 : vector<1x1xf32>
      %c0_23 = arith.constant 0 : index
      %c0_24 = arith.constant 0 : index
      %52 = vector.load %arg3[%c0_23, %c0_24] : memref<1x1xf32, #tpu.memory_space<vmem>>, vector<1x1xf32>
      tpu.vector_store %arg3[%c0_23, %c0_24], %51 {strides = array<i32>} : memref<1x1xf32, #tpu.memory_space<vmem>>, vector<1x1xf32>,
    } else {
    }
    return
  }
  func.func @transform_0(%arg0: i32) -> (i32, i32) {
    %c0_i32 = arith.constant 0 : i32
    %c0_i32_0 = arith.constant 0 : i32
    return %c0_i32, %arg0 : i32, i32
  }
  func.func @transform_1(%arg0: i32) -> (i32, i32) {
    %c0_i32 = arith.constant 0 : i32
    %c0_i32_0 = arith.constant 0 : i32
    return %c0_i32, %arg0 : i32, i32
  }
  func.func @transform_2(%arg0: i32) -> (i32, i32) {
    %c0_i32 = arith.constant 0 : i32
    %c0_i32_0 = arith.constant 0 : i32
    %c0_i32_1 = arith.constant 0 : i32
    return %c0_i32, %c0_i32_0 : i32, i32
  }
}

</mosaic_0001>

<llo_original>
// kernel: focal_loss.1
$region0: #{focal_loss.1}
  #allocation0 [shape = 'u32[]', space=smem, size = 0x4, offset = 0x4, fixed_abs, tag = 'smem constant byte address 0x4 - core index']
  #allocation1 [shape = 'u32[72,128]{1,0:T(1,128)}', space=vmem, size = 0x9000, scoped, tag = 'internal scratch']
  #allocation2 [shape = 'f32[1,1]{1,0:T(1,128)}', space=vmem, size = 0x200, scoped, tag = 'scratch operand']
  %s0 = inlined_call_operand.vmem [shape: f32[5,8], index: 0, kind: input, shape index: {}]
  %s1 = inlined_call_operand.vmem [shape: s32[1,8], index: 1, kind: input, shape index: {}]
  %s2 = inlined_call_operand.hbm [shape: f32[1,1], index: 2, kind: output, shape index: {}]
  %s3 = sld [smem:[#allocation0]]
  $region26: #{focal_loss.1} parent=0
    _
  %s5 = ssub.s32 1, %s3
  %s6 = scalar_select 0, %s5, %s3
  $region1: #{focal_loss.1} parent=0
    #allocation3 [shape = 'u8[512]{0}', space=vmem, size = 0x400, scoped, tag = 'output window, operand 0, single buffered']
    #allocation4 [shape = 's32[1]{0}', space=sflag, size = 0x4, scoped, tag = 'scoped memory for focal_loss.1']
    %7 = vsyncpa [#allocation4], 0
    // Predicated region
    $region2: #{focal_loss.1} parent=1 // pred_check
      _
    $region3: #{focal_loss.1} parent=1 // pred_check_branch
      %9 = sbr.rel (0) target = $region5
    $region4: #{focal_loss.1} parent=1 // pred_region
      _
    $region5: #{focal_loss.1} parent=1 // pred_fallthru
      _
    // Predicated region
    $region6: #{focal_loss.1} parent=1 // pred_check
      _
    $region7: #{focal_loss.1} parent=1 // pred_check_branch
      %11 = sbr.rel (0) target = $region9
    $region8: #{focal_loss.1} parent=1 // pred_region
      _
    $region9: #{focal_loss.1} parent=1 // pred_fallthru
      _
    %p12 = scmp.eq.s32.totalorder 0, 0
    // Predicated region
    $region10: #{focal_loss.1} parent=1 // pred_check
      %p13 = pneg %p12
    $region11: #{focal_loss.1} parent=1 // pred_check_branch
      %15 = sbr.rel (%p13) target = $region13
    $region12: #{focal_loss.1} parent=1 // pred_region
      %vm16 = vcmask 0
      %17 = vst.msk [vmem:[#allocation2] sm:$0x1] %vm16, 0.0
    $region13: #{focal_loss.1} parent=1 // pred_fallthru
      _
    %v18 = vld [vmem:[%s0] sm:$0x1f]
    %v19 = vld [vmem:[%s1] sm:$0x1]
    %vm20 = vcmask 61440
    %v21 = vsel %vm20, %v18, -inf
    %v22 = vrot.slane %v21, 4
    %v23 = vmax.f32 %v21, %v22
    %v24 = vrot.slane %v23, 2
    %v25 = vmax.f32 %v23, %v24
    %v26 = vrot.slane %v25, 1
    %v27 = vmax.f32 %v25, %v26
    %v28 = vsub.f32 %v18, %v27
    %v29 = vmul.f32 %v28, 1.442695
    %v30 = vpow.pop %v29
    %v31 = vsel %vm20, %v30, 0.0
    %v32 = vrot.slane %v31, 4
    %v33 = vadd.f32 %v31, %v32
    %v34 = vrot.slane %v33, 2
    %v35 = vadd.f32 %v33, %v34
    %v36 = vrot.slane %v35, 1
    %v37 = vadd.f32 %v35, %v36
    %v38 = vlog2.pop %v37
    %v39 = vmul.f32 %v38, 0.6931472
    %v40 = vadd.f32 %v39, %v27
    %v41 = vlaneseq
    %v42 = vshrl.u32 %v41, 7
    %v43 = vperm.slane %v19, 0
    %vm44 = vcmp.eq.s32.totalorder %v42, %v43
    %v45 = vsel %vm44, %v18, 0.0
    %v46 = vsel %vm20, %v45, 0.0
    %v47 = vrot.slane %v46, 4
    %v48 = vadd.f32 %v46, %v47
    %v49 = vrot.slane %v48, 2
    %v50 = vadd.f32 %v48, %v49
    %v51 = vrot.slane %v50, 1
    %v52 = vadd.f32 %v50, %v51
    %v53 = vsub.f32 %v40, %v52
    %v54 = vlaneseq
    %v55 = vand.u32 %v54, 127
    %s56 = smul.u32 0, 8
    %v57 = vstv %s56
    %v58 = vadd.s32 %v55, %v57
    %vm59 = vcmp.lt.s32.totalorder %v58, 8
    %v60 = vsel %vm59, %v53, 0.0
    %v61 = vld [vmem:[#allocation2] sm:$0x1]
    %vm62 = vcmask 64512
    %v63 = vsel %vm62, %v60, 0.0
    %64 = vadd.xlane.f32.xlu0 %v63
    %v65 = vpop.xlane.xlu0 %64
    %v66 = vadd.f32 %v61, %v65
    %vm67 = vcmask 0
    %68 = vst.msk [vmem:[#allocation2] sm:$0x1] %vm67, %v66
    // Predicated region
    $region14: #{focal_loss.1} parent=1 // pred_check
      %p69 = pneg %p12
    $region15: #{focal_loss.1} parent=1 // pred_check_branch
      %71 = sbr.rel (%p69) target = $region17
    $region16: #{focal_loss.1} parent=1 // pred_region
      %v72 = vld [vmem:[#allocation2] sm:$0x1]
      %v73 = vrcp.pop 8.0
      %v74 = vmul.f32 8.0, %v73
      %v75 = vsub.f32 1.0, %v74
      %v76 = vmul.f32 %v73, %v75
      %v77 = vadd.f32 %v73, %v76
      %vm78 = vweird.f32 %v73
      %v79 = vsel %vm78, %v73, %v77
      %v80 = vmul.f32 %v72, %v79
      %v81 = vsub.f32 0.0, %v80
      %v82 = vmul.f32 %v81, 1.442695
      %v83 = vpow.pop %v82
      %v84 = vsub.f32 1.0, %v83
      %v85 = vmul.f32 %v84, %v84
      %v86 = vmul.f32 %v85, %v80
      %87 = vst.msk [vmem:[#allocation3] sm:$0x1] %vm67, %v86
    $region17: #{focal_loss.1} parent=1 // pred_fallthru
      _
    // Predicated region
    $region18: #{focal_loss.1} parent=1 // pred_check
      _
    $region19: #{focal_loss.1} parent=1 // pred_check_branch
      %89 = sbr.rel (0) target = $region21
    $region20: #{focal_loss.1} parent=1 // pred_region
      %91 = vsyncadd [#allocation4], 0
      %s93 = sshll.u32 [#allocation3], 4
      %s94 = int_to_ptr.vmem [resolvable:$true] %s93
      %s95 = sshll.u32 %s2, 4
      %s96 = int_to_ptr.hbm [resolvable:$true] %s95
      %98 = dma.vmem_to_hbm [thread:$0]  %s94, 16, %s96, [#allocation4]
    $region21: #{focal_loss.1} parent=1 // pred_fallthru
      _
    // Predicated region
    $region22: #{focal_loss.1} parent=1 // pred_check
      _
    $region23: #{focal_loss.1} parent=1 // pred_check_branch
      %100 = sbr.rel (0) target = $region25
    $region24: #{focal_loss.1} parent=1 // pred_region
      %102 = dma.done [#allocation4], 16
    $region25: #{focal_loss.1} parent=1 // pred_fallthru
      _
    %103 = vsyncpa [#allocation4], 1

</llo_original>
